<compile_context>
chip_gen: v7x
topology: tpu7x:2x2x1
jax: 0.10.0
libtpu: 0.0.40
codegen_flags: <defaults>
</compile_context>

<pallas_src>
import functools

import jax
import jax.numpy as jnp
import numpy as np
from jax.experimental import pallas as pl
from jax.experimental.pallas import tpu as pltpu


def _downsample_kernel(x_ref, wdw_ref, bdw_ref, wpw_ref, bpw_ref,
                       gamma_ref, beta_ref, out_ref,
                       *, kernel_size, stride, tile_l, c_in, eps):
    """One (batch, time-tile) grid step.

    x_ref   : (1, R, stride*C_in)  zero-padded, phase-merged input; resident in
                                   VMEM for the whole batch.
    out_ref : (1, C_out, TL)       NCL output tile (time on the lane axis).
    """
    t = pl.program_id(1)
    row0 = pl.multiple_of(t * tile_l, tile_l)

    def tap(k):
        # x_pad[(t*stride)+k, c] == x_ref[0, t + k//stride, (k % stride)*C_in + c]
        r = k // stride
        c0 = (k % stride) * c_in
        return x_ref[0, pl.ds(row0 + r, tile_l), c0:c0 + c_in].astype(jnp.float32)

    wdw = wdw_ref[...]                                    # (K, C_in)

    # ---- depthwise conv: init from tap 0 + bias (no zeros pass), accumulate ----
    y = tap(0) * wdw[0:1, :] + bdw_ref[...]               # (TL, C_in)
    for k in range(1, kernel_size):                       # K is small; static unroll
        y = y + tap(k) * wdw[k:k + 1, :]
    y = jnp.maximum(y, 0.0)                               # ReLU

    # ---- pointwise (1x1) conv, emitted directly as (C_out, TL) so the store is
    # lane-dense NCL.  'NT' contraction (last dims of both operands).
    # TODO(synk): for tiny C_in (<128) the MXU contraction is mostly idle; the op
    # is memory-bound so we do not zero-pad the contraction dimension here.
    z = jax.lax.dot_general(
        wpw_ref[...], y,
        dimension_numbers=(((1,), (1,)), ((), ())),
        preferred_element_type=jnp.float32)               # (C_out, TL)
    z = z + bpw_ref[...]                                  # (C_out, 1) broadcast

    # ---- LayerNorm over the channel (sublane) axis ----
    mean = jnp.mean(z, axis=0, keepdims=True)             # (1, TL)
    zc = z - mean
    var = jnp.mean(zc * zc, axis=0, keepdims=True)
    zn = zc * jax.lax.rsqrt(var + eps)
    zn = zn * gamma_ref[...] + beta_ref[...]              # (C_out, 1) broadcasts

    # ---- Dropout: inference mode -> identity ----
    # TODO(synk): training-mode dropout would use pltpu.prng_seed/prng_random_bits.
    out_ref[0] = zn.astype(out_ref.dtype)


def _choose_time_tile(l_out, c_out):
    """Lane-dense time tile.

    Short sequences -> one full tile (block == full dim, always legal).
    Long sequences  -> 512/1024-lane tiles (multiples of 128 -> unmasked vst),
    with the larger tile only when the double-buffered output block stays small.
    """
    max_tile = 1024 if (c_out * 1024 * 4 * 2) <= (4 << 20) else 512
    if l_out <= max_tile:
        return l_out, 1
    return max_tile, pl.cdiv(l_out, max_tile)


def downsample_forward(features, sequence_lengths, params,
                       *, kernel_size, stride, eps=1e-5):
    """features: (B, C_in, L); sequence_lengths: (B,).  Returns NCL (B, C_out, L_out)."""
    B, C_in, L = features.shape
    K, s = kernel_size, stride
    pad = K // 2
    C_out = params["w_pw"].shape[1]
    L_out = (L + 2 * pad - K) // s + 1

    TL, nT = _choose_time_tile(L_out, C_out)
    # Rows of the phase-merged input so every tap of every output position in
    # every (possibly partial) time tile is in range; never trim real samples.
    rows_needed = nT * TL + (K - 1) // s
    R = max(rows_needed, -(-(L + pad) // s))

    # ---- glue: O(input) ops only, no KxL_out unfolding ----
    x_t = jnp.transpose(features, (0, 2, 1))                           # (B, L, C_in)
    x_t = jnp.pad(x_t, ((0, 0), (pad, R * s - L - pad), (0, 0)))       # (B, R*s, C_in)
    x_r = x_t.reshape(B, R, s * C_in)        # contiguous reshape: lane = (phase, C_in)

    f32 = jnp.float32
    w_dw = params["w_dw"].reshape(C_in, K).T.astype(f32)               # (K, C_in)
    b_dw = params["b_dw"].reshape(1, C_in).astype(f32)
    w_pw = params["w_pw"].T.astype(f32)                                # (C_out, C_in)
    b_pw = params["b_pw"].reshape(C_out, 1).astype(f32)
    gamma = params["gamma"].reshape(C_out, 1).astype(f32)
    beta = params["beta"].reshape(C_out, 1).astype(f32)

    kernel = functools.partial(_downsample_kernel, kernel_size=K, stride=s,
                               tile_l=TL, c_in=C_in, eps=eps)

    # VMEM budget / cost hints derived from the actual block shapes.
    itemsize = jnp.dtype(features.dtype).itemsize
    in_block = R * s * C_in * itemsize
    out_block = C_out * TL * 4
    w_bytes = (K * C_in + C_in + C_out * C_in + 3 * C_out) * 4
    vmem_limit = int(min(max(2 * (in_block + out_block) + 2 * w_bytes + (8 << 20),
                             16 << 20), 64 << 20))
    flops = int(B * L_out * (C_in * (2 * K + 1) + 2 * C_in * C_out + 9 * C_out))
    bytes_accessed = int(B * (in_block + C_out * L_out * itemsize) + w_bytes)

    out = pl.pallas_call(
        kernel,
        # Exact output length: the last time tile is a partial block that Pallas
        # masks on store -> no padded output + wrapper slice round trip.
        out_shape=jax.ShapeDtypeStruct((B, C_out, L_out), features.dtype),
        grid=(B, nT),
        in_specs=[
            # Full padded sequence per batch, resident across its time tiles
            # (constant block index along t => DMA'd from HBM once per batch).
            # TODO(synk): halo-tiled input blocks for extremely long sequences
            # whose per-batch slab would not fit VMEM.
            pl.BlockSpec((1, R, s * C_in), lambda b, t: (b, 0, 0)),
            pl.BlockSpec((K, C_in), lambda b, t: (0, 0)),
            pl.BlockSpec((1, C_in), lambda b, t: (0, 0)),
            pl.BlockSpec((C_out, C_in), lambda b, t: (0, 0)),
            pl.BlockSpec((C_out, 1), lambda b, t: (0, 0)),
            pl.BlockSpec((C_out, 1), lambda b, t: (0, 0)),
            pl.BlockSpec((C_out, 1), lambda b, t: (0, 0)),
        ],
        out_specs=pl.BlockSpec((1, C_out, TL), lambda b, t: (b, 0, t)),
        compiler_params=pltpu.CompilerParams(
            dimension_semantics=("parallel", "parallel"),
            vmem_limit_bytes=vmem_limit),
        cost_estimate=pl.CostEstimate(flops=flops,
                                      transcendentals=int(B * L_out),
                                      bytes_accessed=bytes_accessed),
    )(x_r, w_dw, b_dw, w_pw, b_pw, gamma, beta)

    new_sequence_lengths = (sequence_lengths + 2 * pad - K) // s + 1
    return out, new_sequence_lengths


def _reference_forward(features, sequence_lengths, params,
                       *, kernel_size, stride, eps=1e-5):
    """Pure-JAX reference matching the PyTorch module (eval mode)."""
    B, C_in, L = features.shape
    K = kernel_size
    pad = K // 2

    y = jax.lax.conv_general_dilated(
        features, params["w_dw"], window_strides=(stride,),
        padding=[(pad, pad)],
        dimension_numbers=("NCH", "OIH", "NCH"),
        feature_group_count=C_in)
    y = y + params["b_dw"][None, :, None]
    y = jnp.maximum(y, 0.0)
    z = jnp.einsum("ncl,co->nol", y, params["w_pw"]) + params["b_pw"][None, :, None]
    zt = jnp.transpose(z, (0, 2, 1))
    mean = jnp.mean(zt, axis=-1, keepdims=True)
    var = jnp.mean((zt - mean) ** 2, axis=-1, keepdims=True)
    zt = (zt - mean) / jnp.sqrt(var + eps)
    zt = zt * params["gamma"] + params["beta"]
    z = jnp.transpose(zt, (0, 2, 1))
    new_len = (sequence_lengths + 2 * pad - K) // stride + 1
    return z, new_len


if __name__ == "__main__":
    # Small shapes consistent with the module's forward pass.
    B, C_in, C_out, L = 2, 4, 8, 16
    kernel_size, stride, dropout_prob = 3, 2, 0.1  # dropout unused (inference)

    key = jax.random.PRNGKey(0)
    k_x, k_wd, k_bd, k_wp, k_bp, k_g, k_b, k_len = jax.random.split(key, 8)

    features = jax.random.normal(k_x, (B, C_in, L), dtype=jnp.float32)
    sequence_lengths = jnp.array([16, 12], dtype=jnp.int32)

    params = {
        # PyTorch depthwise Conv1d weight: (in_channels, 1, kernel_size)
        "w_dw": 0.3 * jax.random.normal(k_wd, (C_in, 1, kernel_size), jnp.float32),
        "b_dw": 0.1 * jax.random.normal(k_bd, (C_in,), jnp.float32),
        # PyTorch pointwise Conv1d weight (C_out, C_in, 1) stored as (C_in, C_out)
        "w_pw": 0.3 * jax.random.normal(k_wp, (C_in, C_out), jnp.float32),
        "b_pw": 0.1 * jax.random.normal(k_bp, (C_out,), jnp.float32),
        "gamma": 1.0 + 0.05 * jax.random.normal(k_g, (C_out,), jnp.float32),
        "beta": 0.05 * jax.random.normal(k_b, (C_out,), jnp.float32),
    }

    out, new_lens = downsample_forward(
        features, sequence_lengths, params,
        kernel_size=kernel_size, stride=stride)
    out = jax.block_until_ready(out)
    new_lens = jax.block_until_ready(new_lens)

    # Verify against the pure-JAX reference.
    ref_out, ref_lens = _reference_forward(
        features, sequence_lengths, params,
        kernel_size=kernel_size, stride=stride)
    np.testing.assert_allclose(np.asarray(out), np.asarray(ref_out),
                               rtol=1e-5, atol=1e-5)
    np.testing.assert_array_equal(np.asarray(new_lens), np.asarray(ref_lens))

    print("KERNEL_OK")
</pallas_src>

<mosaic_0001>
module attributes {stable_mosaic.version = 11 : i64} {
  func.func @_downsample_kernel(%arg0: i32, %arg1: i32, %arg2: memref<1x9x8xf32, #tpu.memory_space<vmem>>, %arg3: memref<3x4xf32, #tpu.memory_space<vmem>>, %arg4: memref<1x4xf32, #tpu.memory_space<vmem>>, %arg5: memref<8x4xf32, #tpu.memory_space<vmem>>, %arg6: memref<8x1xf32, #tpu.memory_space<vmem>>, %arg7: memref<8x1xf32, #tpu.memory_space<vmem>>, %arg8: memref<8x1xf32, #tpu.memory_space<vmem>>, %arg9: memref<1x8x8xf32, #tpu.memory_space<vmem>>) attributes {dimension_semantics = [#tpu.dimension_semantics<parallel>, #tpu.dimension_semantics<parallel>], iteration_bounds = array<i64: 2, 1>, scalar_prefetch = 0 : i64, scratch_operands = 0 : i64, tpu.core_type = #tpu.core_type<tc>, window_params = [{transform_indices = @transform_0, window_bounds = array<i64: 1, 9, 8>}, {pipeline_mode = #tpu.pipeline_mode<synchronous>, transform_indices = @transform_1, window_bounds = array<i64: 3, 4>}, {pipeline_mode = #tpu.pipeline_mode<synchronous>, transform_indices = @transform_2, window_bounds = array<i64: 1, 4>}, {pipeline_mode = #tpu.pipeline_mode<synchronous>, transform_indices = @transform_3, window_bounds = array<i64: 8, 4>}, {pipeline_mode = #tpu.pipeline_mode<synchronous>, transform_indices = @transform_4, window_bounds = array<i64: 8, 1>}, {pipeline_mode = #tpu.pipeline_mode<synchronous>, transform_indices = @transform_5, window_bounds = array<i64: 8, 1>}, {pipeline_mode = #tpu.pipeline_mode<synchronous>, transform_indices = @transform_6, window_bounds = array<i64: 8, 1>}, {transform_indices = @transform_7, window_bounds = array<i64: 1, 8, 8>}]} {
    %c8_i32 = arith.constant 8 : i32
    %0 = arith.muli %arg1, %c8_i32 : i32
    %1 = tpu.assume_multiple %0, 8 : i32
    %c0 = arith.constant 0 : index
    %c0_0 = arith.constant 0 : index
    %2 = vector.load %arg3[%c0, %c0_0] : memref<3x4xf32, #tpu.memory_space<vmem>>, vector<3x4xf32>
    %c0_i32 = arith.constant 0 : i32
    %3 = arith.addi %1, %c0_i32 : i32
    %c0_1 = arith.constant 0 : index
    %4 = arith.index_cast %3 : i32 to index
    %c0_2 = arith.constant 0 : index
    %5 = vector.load %arg2[%c0_1, %4, %c0_2] : memref<1x9x8xf32, #tpu.memory_space<vmem>>, vector<1x8x4xf32>
    %6 = vector.shape_cast %5 : vector<1x8x4xf32> to vector<8x4xf32>
    %7 = vector.extract_strided_slice %2 {offsets = [0, 0], sizes = [1, 4], strides = [1, 1]} : vector<3x4xf32> to vector<1x4xf32>
    %8 = vector.broadcast %7 : vector<1x4xf32> to vector<8x4xf32>
    %9 = arith.mulf %6, %8 : vector<8x4xf32>
    %c0_3 = arith.constant 0 : index
    %c0_4 = arith.constant 0 : index
    %10 = vector.load %arg4[%c0_3, %c0_4] : memref<1x4xf32, #tpu.memory_space<vmem>>, vector<1x4xf32>
    %11 = vector.broadcast %10 : vector<1x4xf32> to vector<8x4xf32>
    %12 = arith.addf %9, %11 : vector<8x4xf32>
    %c0_i32_5 = arith.constant 0 : i32
    %13 = arith.addi %1, %c0_i32_5 : i32
    %c0_6 = arith.constant 0 : index
    %14 = arith.index_cast %13 : i32 to index
    %c4 = arith.constant 4 : index
    %15 = vector.load %arg2[%c0_6, %14, %c4] : memref<1x9x8xf32, #tpu.memory_space<vmem>>, vector<1x8x4xf32>
    %16 = vector.shape_cast %15 : vector<1x8x4xf32> to vector<8x4xf32>
    %17 = vector.extract_strided_slice %2 {offsets = [1, 0], sizes = [1, 4], strides = [1, 1]} : vector<3x4xf32> to vector<1x4xf32>
    %18 = vector.broadcast %17 : vector<1x4xf32> to vector<8x4xf32>
    %19 = arith.mulf %16, %18 : vector<8x4xf32>
    %20 = arith.addf %12, %19 : vector<8x4xf32>
    %c1_i32 = arith.constant 1 : i32
    %21 = arith.addi %1, %c1_i32 : i32
    %c0_7 = arith.constant 0 : index
    %22 = arith.index_cast %21 : i32 to index
    %c0_8 = arith.constant 0 : index
    %23 = vector.load %arg2[%c0_7, %22, %c0_8] : memref<1x9x8xf32, #tpu.memory_space<vmem>>, vector<1x8x4xf32>
    %24 = vector.shape_cast %23 : vector<1x8x4xf32> to vector<8x4xf32>
    %25 = vector.extract_strided_slice %2 {offsets = [2, 0], sizes = [1, 4], strides = [1, 1]} : vector<3x4xf32> to vector<1x4xf32>
    %26 = vector.broadcast %25 : vector<1x4xf32> to vector<8x4xf32>
    %27 = arith.mulf %24, %26 : vector<8x4xf32>
    %28 = arith.addf %20, %27 : vector<8x4xf32>
    %cst = arith.constant 0.000000e+00 : f32
    %29 = vector.broadcast %cst : f32 to vector<8x4xf32>
    %30 = arith.maximumf %28, %29 : vector<8x4xf32>
    %c0_9 = arith.constant 0 : index
    %c0_10 = arith.constant 0 : index
    %31 = vector.load %arg5[%c0_9, %c0_10] : memref<8x4xf32, #tpu.memory_space<vmem>>, vector<8x4xf32>
    %cst_11 = arith.constant dense<0.000000e+00> : vector<8x8xf32>
    %32 = tpu.matmul %31, %30, %cst_11 {dimension_numbers = #tpu.dot_dimension_numbers<[1], [1], [0], [0], [0, 0, 1, 0], [], []>} : vector<8x4xf32>, vector<8x4xf32>, vector<8x8xf32> -> vector<8x8xf32>
    %c0_12 = arith.constant 0 : index
    %c0_13 = arith.constant 0 : index
    %33 = vector.load %arg6[%c0_12, %c0_13] : memref<8x1xf32, #tpu.memory_space<vmem>>, vector<8x1xf32>
    %34 = vector.broadcast %33 : vector<8x1xf32> to vector<8x8xf32>
    %35 = arith.addf %32, %34 : vector<8x8xf32>
    %cst_14 = arith.constant dense<0.000000e+00> : vector<8xf32>
    %36 = vector.multi_reduction <add>, %35, %cst_14 [0] : vector<8x8xf32> to vector<8xf32>
    %37 = vector.shape_cast %36 : vector<8xf32> to vector<1x8xf32>
    %cst_15 = arith.constant 8.000000e+00 : f32
    %38 = vector.broadcast %cst_15 : f32 to vector<1x8xf32>
    %39 = arith.divf %37, %38 : vector<1x8xf32>
    %40 = vector.broadcast %39 : vector<1x8xf32> to vector<8x8xf32>
    %41 = arith.subf %35, %40 : vector<8x8xf32>
    %42 = arith.mulf %41, %41 : vector<8x8xf32>
    %cst_16 = arith.constant dense<0.000000e+00> : vector<8xf32>
    %43 = vector.multi_reduction <add>, %42, %cst_16 [0] : vector<8x8xf32> to vector<8xf32>
    %44 = vector.shape_cast %43 : vector<8xf32> to vector<1x8xf32>
    %cst_17 = arith.constant 8.000000e+00 : f32
    %45 = vector.broadcast %cst_17 : f32 to vector<1x8xf32>
    %46 = arith.divf %44, %45 : vector<1x8xf32>
    %cst_18 = arith.constant 9.99999974E-6 : f32
    %47 = vector.broadcast %cst_18 : f32 to vector<1x8xf32>
    %48 = arith.addf %46, %47 : vector<1x8xf32>
    %49 = math.rsqrt %48 : vector<1x8xf32>
    %50 = vector.broadcast %49 : vector<1x8xf32> to vector<8x8xf32>
    %51 = arith.mulf %41, %50 : vector<8x8xf32>
    %c0_19 = arith.constant 0 : index
    %c0_20 = arith.constant 0 : index
    %52 = vector.load %arg7[%c0_19, %c0_20] : memref<8x1xf32, #tpu.memory_space<vmem>>, vector<8x1xf32>
    %53 = vector.broadcast %52 : vector<8x1xf32> to vector<8x8xf32>
    %54 = arith.mulf %51, %53 : vector<8x8xf32>
    %c0_21 = arith.constant 0 : index
    %c0_22 = arith.constant 0 : index
    %55 = vector.load %arg8[%c0_21, %c0_22] : memref<8x1xf32, #tpu.memory_space<vmem>>, vector<8x1xf32>
    %56 = vector.broadcast %55 : vector<8x1xf32> to vector<8x8xf32>
    %57 = arith.addf %54, %56 : vector<8x8xf32>
    %c0_23 = arith.constant 0 : index
    %c0_24 = arith.constant 0 : index
    %c0_25 = arith.constant 0 : index
    %58 = vector.load %arg9[%c0_23, %c0_24, %c0_25] : memref<1x8x8xf32, #tpu.memory_space<vmem>>, vector<1x8x8xf32>
    %59 = vector.shape_cast %58 : vector<1x8x8xf32> to vector<8x8xf32>
    %60 = vector.shape_cast %57 : vector<8x8xf32> to vector<1x8x8xf32>
    tpu.vector_store %arg9[%c0_23, %c0_24, %c0_25], %60 {strides = array<i32>} : memref<1x8x8xf32, #tpu.memory_space<vmem>>, vector<1x8x8xf32>,
    return
  }
  func.func @transform_0(%arg0: i32, %arg1: i32) -> (i32, i32, i32) {
    %c0_i32 = arith.constant 0 : i32
    %c0_i32_0 = arith.constant 0 : i32
    %c0_i32_1 = arith.constant 0 : i32
    return %arg0, %c0_i32, %c0_i32_0 : i32, i32, i32
  }
  func.func @transform_1(%arg0: i32, %arg1: i32) -> (i32, i32) {
    %c0_i32 = arith.constant 0 : i32
    %c0_i32_0 = arith.constant 0 : i32
    %c0_i32_1 = arith.constant 0 : i32
    return %c0_i32, %c0_i32_0 : i32, i32
  }
  func.func @transform_2(%arg0: i32, %arg1: i32) -> (i32, i32) {
    %c0_i32 = arith.constant 0 : i32
    %c0_i32_0 = arith.constant 0 : i32
    %c0_i32_1 = arith.constant 0 : i32
    return %c0_i32, %c0_i32_0 : i32, i32
  }
  func.func @transform_3(%arg0: i32, %arg1: i32) -> (i32, i32) {
    %c0_i32 = arith.constant 0 : i32
    %c0_i32_0 = arith.constant 0 : i32
    %c0_i32_1 = arith.constant 0 : i32
    return %c0_i32, %c0_i32_0 : i32, i32
  }
  func.func @transform_4(%arg0: i32, %arg1: i32) -> (i32, i32) {
    %c0_i32 = arith.constant 0 : i32
    %c0_i32_0 = arith.constant 0 : i32
    %c0_i32_1 = arith.constant 0 : i32
    return %c0_i32, %c0_i32_0 : i32, i32
  }
  func.func @transform_5(%arg0: i32, %arg1: i32) -> (i32, i32) {
    %c0_i32 = arith.constant 0 : i32
    %c0_i32_0 = arith.constant 0 : i32
    %c0_i32_1 = arith.constant 0 : i32
    return %c0_i32, %c0_i32_0 : i32, i32
  }
  func.func @transform_6(%arg0: i32, %arg1: i32) -> (i32, i32) {
    %c0_i32 = arith.constant 0 : i32
    %c0_i32_0 = arith.constant 0 : i32
    %c0_i32_1 = arith.constant 0 : i32
    return %c0_i32, %c0_i32_0 : i32, i32
  }
  func.func @transform_7(%arg0: i32, %arg1: i32) -> (i32, i32, i32) {
    %c0_i32 = arith.constant 0 : i32
    %c0_i32_0 = arith.constant 0 : i32
    return %arg0, %c0_i32, %arg1 : i32, i32, i32
  }
}

</mosaic_0001>

<llo_original>
// kernel: tpu_custom_call.1
$region0: #{tpu_custom_call.1}
  #allocation0 [shape = 'u32[]', space=smem, size = 0x4, offset = 0x4, fixed_abs, tag = 'smem constant byte address 0x4 - core index']
  #allocation1 [shape = 'u32[144,128]{1,0:T(1,128)}', space=vmem, size = 0x12000, scoped, tag = 'internal scratch']
  %s0 = inlined_call_operand.vmem [shape: f32[2,9,8], index: 0, kind: input, shape index: {}]
  %s1 = inlined_call_operand.vmem [shape: f32[3,4], index: 1, kind: input, shape index: {}]
  %s2 = inlined_call_operand.vmem [shape: f32[1,4], index: 2, kind: input, shape index: {}]
  %s3 = inlined_call_operand.vmem [shape: f32[8,4], index: 3, kind: input, shape index: {}]
  %s4 = inlined_call_operand.vmem [shape: f32[8,1], index: 4, kind: input, shape index: {}]
  %s5 = inlined_call_operand.vmem [shape: f32[8,1], index: 5, kind: input, shape index: {}]
  %s6 = inlined_call_operand.vmem [shape: f32[8,1], index: 6, kind: input, shape index: {}]
  %s7 = inlined_call_operand.hbm [shape: f32[2,8,8], index: 7, kind: output, shape index: {}]
  %s8 = sld [smem:[#allocation0]]
  $region61: #{tpu_custom_call.1} parent=0
    _
  %s10 = ssub.s32 1, %s8
  %s11 = scalar_select 0, %s10, %s8
  $region1: #{tpu_custom_call.1} parent=0
    #allocation2 [shape = 'u8[8192]{0}', space=vmem, size = 0x2000, scoped, tag = 'output window, operand 0']
    #allocation3 [shape = 's32[2]{0}', space=sflag, size = 0x8, scoped, tag = 'scoped memory for tpu_custom_call.1']
    %12 = vsyncpa [#allocation3], 0
    %s13 = scalar_lea.sflag [#allocation3], 1
    %14 = vsyncpa %s13, 0
    loop: start=0, step=1, limit=4
    $region2: #{tpu_custom_call.1} parent=1 // loop_pre_header
      _
    $region3: #{tpu_custom_call.1} parent=1 // loop_header
      %s16 = sphi 0, %s20
      %p17 = scmp.ge.s32.totalorder %s16, 4
      %s23 = sphi 0, %s35
      %s24 = sphi 0, %s31
      %s25 = sphi 0, %s23
      %s26 = sphi 0, %s24
      %s27 = sphi 0, %s25
      %s28 = sphi 0, %s26
      %s38 = sphi 0, %s40
      %s41 = sphi 0, %s38
      %s42 = sphi 0, %s41
      %s58 = sphi 0, %s42
      %s62 = sphi 0, %s62
      %s64 = sphi 0, %s62
      %s65 = sphi 0, %s64
      %s79 = sphi 0, %s65
      %s83 = sphi 0, %s83
      %s85 = sphi 0, %s83
      %s86 = sphi 0, %s85
      %s100 = sphi 0, %s86
      %s104 = sphi 0, %s104
      %s106 = sphi 0, %s104
      %s107 = sphi 0, %s106
      %s121 = sphi 0, %s107
      %s125 = sphi 0, %s125
      %s127 = sphi 0, %s125
      %s128 = sphi 0, %s127
      %s142 = sphi 0, %s128
      %s146 = sphi 0, %s146
      %s148 = sphi 0, %s146
      %s149 = sphi 0, %s148
      %s163 = sphi 0, %s149
      %s167 = sphi 0, %s167
      %s169 = sphi 0, %s167
      %s170 = sphi 0, %s169
      %s184 = sphi 0, %s170
      %s192 = sphi 0, %s194
      %s195 = sphi 0, %s192
      %s196 = sphi 0, %s195
      %s212 = sphi 0, %s196
    $region4: #{tpu_custom_call.1} parent=1 // loop_header_branch
      %19 = sbr.rel (%p17) target = $region8
    $region5: #{tpu_custom_call.1} parent=1 // loop_body
      %s21 = ssub.s32 %s16, 1
      %s22 = ssub.s32 %s16, 2
      %s29 = sadd.s32 1, %s24
      %p30 = scmp.ge.s32.totalorder %s29, 1
      %s31 = scalar_select %p30, 0, %s29
      %s32 = sadd.s32 1, %s23
      %s33 = scalar_select %p30, %s32, %s23
      %p34 = scmp.ge.s32.totalorder %s33, 2
      %s35 = scalar_select %p34, 0, %s33
      %s36 = ssub.s32 %s23, %s35
      %p37 = scmp.eq.s32.totalorder %s36, 0
      %s39 = sadd.s32 %s38, 1
      %s40 = scalar_select %p37, %s38, %s39
      %p43 = pneg %p37
      %p44 = scmp.eq.s32.totalorder %s16, 1
      %p45 = por %p43, %p44
      %p46 = scmp.ne.s32.totalorder %s38, %s41
      %p47 = scmp.eq.s32.totalorder %s16, 0
      %p48 = por %p46, %p47
      %p49 = scmp.ne.s32.totalorder %s38, %s41
      %p50 = scmp.eq.s32.totalorder %s21, 1
      %p51 = por %p49, %p50
      %p52 = scmp.ne.s32.totalorder %s41, %s42
      %p53 = scmp.eq.s32.totalorder %s21, 0
      %p54 = por %p52, %p53
      %p55 = scmp.ne.s32.totalorder %s41, %s42
      %p56 = scmp.eq.s32.totalorder %s22, 1
      %p57 = por %p55, %p56
      %p59 = scmp.ne.s32.totalorder %s42, %s58
      %p60 = scmp.eq.s32.totalorder %s22, 0
      %p61 = por %p59, %p60
      %s63 = sadd.s32 %s62, 1
      %p66 = scmp.eq.s32.totalorder %s16, 1
      %p67 = scmp.ne.s32.totalorder %s62, %s64
      %p68 = scmp.eq.s32.totalorder %s16, 0
      %p69 = por %p67, %p68
      %p70 = scmp.ne.s32.totalorder %s62, %s64
      %p71 = scmp.eq.s32.totalorder %s21, 1
      %p72 = por %p70, %p71
      %p73 = scmp.ne.s32.totalorder %s64, %s65
      %p74 = scmp.eq.s32.totalorder %s21, 0
      %p75 = por %p73, %p74
      %p76 = scmp.ne.s32.totalorder %s64, %s65
      %p77 = scmp.eq.s32.totalorder %s22, 1
      %p78 = por %p76, %p77
      %p80 = scmp.ne.s32.totalorder %s65, %s79
      %p81 = scmp.eq.s32.totalorder %s22, 0
      %p82 = por %p80, %p81
      %s84 = sadd.s32 %s83, 1
      %p87 = scmp.eq.s32.totalorder %s16, 1
      %p88 = scmp.ne.s32.totalorder %s83, %s85
      %p89 = scmp.eq.s32.totalorder %s16, 0
      %p90 = por %p88, %p89
      %p91 = scmp.ne.s32.totalorder %s83, %s85
      %p92 = scmp.eq.s32.totalorder %s21, 1
      %p93 = por %p91, %p92
      %p94 = scmp.ne.s32.totalorder %s85, %s86
      %p95 = scmp.eq.s32.totalorder %s21, 0
      %p96 = por %p94, %p95
      %p97 = scmp.ne.s32.totalorder %s85, %s86
      %p98 = scmp.eq.s32.totalorder %s22, 1
      %p99 = por %p97, %p98
      %p101 = scmp.ne.s32.totalorder %s86, %s100
      %p102 = scmp.eq.s32.totalorder %s22, 0
      %p103 = por %p101, %p102
      %s105 = sadd.s32 %s104, 1
      %p108 = scmp.eq.s32.totalorder %s16, 1
      %p109 = scmp.ne.s32.totalorder %s104, %s106
      %p110 = scmp.eq.s32.totalorder %s16, 0
      %p111 = por %p109, %p110
      %p112 = scmp.ne.s32.totalorder %s104, %s106
      %p113 = scmp.eq.s32.totalorder %s21, 1
      %p114 = por %p112, %p113
      %p115 = scmp.ne.s32.totalorder %s106, %s107
      %p116 = scmp.eq.s32.totalorder %s21, 0
      %p117 = por %p115, %p116
      %p118 = scmp.ne.s32.totalorder %s106, %s107
      %p119 = scmp.eq.s32.totalorder %s22, 1
      %p120 = por %p118, %p119
      %p122 = scmp.ne.s32.totalorder %s107, %s121
      %p123 = scmp.eq.s32.totalorder %s22, 0
      %p124 = por %p122, %p123
      %s126 = sadd.s32 %s125, 1
      %p129 = scmp.eq.s32.totalorder %s16, 1
      %p130 = scmp.ne.s32.totalorder %s125, %s127
      %p131 = scmp.eq.s32.totalorder %s16, 0
      %p132 = por %p130, %p131
      %p133 = scmp.ne.s32.totalorder %s125, %s127
      %p134 = scmp.eq.s32.totalorder %s21, 1
      %p135 = por %p133, %p134
      %p136 = scmp.ne.s32.totalorder %s127, %s128
      %p137 = scmp.eq.s32.totalorder %s21, 0
      %p138 = por %p136, %p137
      %p139 = scmp.ne.s32.totalorder %s127, %s128
      %p140 = scmp.eq.s32.totalorder %s22, 1
      %p141 = por %p139, %p140
      %p143 = scmp.ne.s32.totalorder %s128, %s142
      %p144 = scmp.eq.s32.totalorder %s22, 0
      %p145 = por %p143, %p144
      %s147 = sadd.s32 %s146, 1
      %p150 = scmp.eq.s32.totalorder %s16, 1
      %p151 = scmp.ne.s32.totalorder %s146, %s148
      %p152 = scmp.eq.s32.totalorder %s16, 0
      %p153 = por %p151, %p152
      %p154 = scmp.ne.s32.totalorder %s146, %s148
      %p155 = scmp.eq.s32.totalorder %s21, 1
      %p156 = por %p154, %p155
      %p157 = scmp.ne.s32.totalorder %s148, %s149
      %p158 = scmp.eq.s32.totalorder %s21, 0
      %p159 = por %p157, %p158
      %p160 = scmp.ne.s32.totalorder %s148, %s149
      %p161 = scmp.eq.s32.totalorder %s22, 1
      %p162 = por %p160, %p161
      %p164 = scmp.ne.s32.totalorder %s149, %s163
      %p165 = scmp.eq.s32.totalorder %s22, 0
      %p166 = por %p164, %p165
      %s168 = sadd.s32 %s167, 1
      %p171 = scmp.eq.s32.totalorder %s16, 1
      %p172 = scmp.ne.s32.totalorder %s167, %s169
      %p173 = scmp.eq.s32.totalorder %s16, 0
      %p174 = por %p172, %p173
      %p175 = scmp.ne.s32.totalorder %s167, %s169
      %p176 = scmp.eq.s32.totalorder %s21, 1
      %p177 = por %p175, %p176
      %p178 = scmp.ne.s32.totalorder %s169, %s170
      %p179 = scmp.eq.s32.totalorder %s21, 0
      %p180 = por %p178, %p179
      %p181 = scmp.ne.s32.totalorder %s169, %s170
      %p182 = scmp.eq.s32.totalorder %s22, 1
      %p183 = por %p181, %p182
      %p185 = scmp.ne.s32.totalorder %s170, %s184
      %p186 = scmp.eq.s32.totalorder %s22, 0
      %p187 = por %p185, %p186
      %s188 = ssub.s32 %s23, %s35
      %s189 = ssub.s32 %s24, %s31
      %s190 = sor.u32 %s188, %s189
      %p191 = scmp.eq.s32.totalorder %s190, 0
      %s193 = sadd.s32 %s192, 1
      %s194 = scalar_select %p191, %s192, %s193
      %p197 = pneg %p191
      %p198 = scmp.eq.s32.totalorder %s16, 1
      %p199 = por %p197, %p198
      %p200 = scmp.ne.s32.totalorder %s192, %s195
      %p201 = scmp.eq.s32.totalorder %s16, 0
      %p202 = por %p200, %p201
      %p203 = scmp.ne.s32.totalorder %s192, %s195
      %p204 = scmp.eq.s32.totalorder %s21, 1
      %p205 = por %p203, %p204
      %p206 = scmp.ne.s32.totalorder %s195, %s196
      %p207 = scmp.eq.s32.totalorder %s21, 0
      %p208 = por %p206, %p207
      %p209 = scmp.ne.s32.totalorder %s195, %s196
      %p210 = scmp.eq.s32.totalorder %s22, 1
      %p211 = por %p209, %p210
      %p213 = scmp.ne.s32.totalorder %s196, %s212
      %p214 = scmp.eq.s32.totalorder %s22, 0
      %p215 = por %p213, %p214
      %p216 = scmp.le.s32.totalorder 1, %s16
      %p217 = scmp.lt.s32.totalorder %s16, 3
      %p218 = pnand %p216, %p217
      %p219 = pneg %p218
      // Predicated region
      $region9: #{tpu_custom_call.1} parent=5 // pred_check
        _
      $region10: #{tpu_custom_call.1} parent=5 // pred_check_branch
        %221 = sbr.rel (%p218) target = $region12
      $region11: #{tpu_custom_call.1} parent=5 // pred_region
        %s222 = ssub.s32 %s16, 1
        // Predicated region
        $region13: #{tpu_custom_call.1} parent=11 // pred_check
          %p223 = pneg %p75
        $region14: #{tpu_custom_call.1} parent=11 // pred_check_branch
          %225 = sbr.rel (%p223) target = $region16
        $region15: #{tpu_custom_call.1} parent=11 // pred_region
          _
        $region16: #{tpu_custom_call.1} parent=11 // pred_fallthru
          _
        // Predicated region
        $region17: #{tpu_custom_call.1} parent=11 // pred_check
          %p226 = pneg %p96
        $region18: #{tpu_custom_call.1} parent=11 // pred_check_branch
          %228 = sbr.rel (%p226) target = $region20
        $region19: #{tpu_custom_call.1} parent=11 // pred_region
          _
        $region20: #{tpu_custom_call.1} parent=11 // pred_fallthru
          _
        // Predicated region
        $region21: #{tpu_custom_call.1} parent=11 // pred_check
          %p229 = pneg %p117
        $region22: #{tpu_custom_call.1} parent=11 // pred_check_branch
          %231 = sbr.rel (%p229) target = $region24
        $region23: #{tpu_custom_call.1} parent=11 // pred_region
          _
        $region24: #{tpu_custom_call.1} parent=11 // pred_fallthru
          _
        // Predicated region
        $region25: #{tpu_custom_call.1} parent=11 // pred_check
          %p232 = pneg %p138
        $region26: #{tpu_custom_call.1} parent=11 // pred_check_branch
          %234 = sbr.rel (%p232) target = $region28
        $region27: #{tpu_custom_call.1} parent=11 // pred_region
          _
        $region28: #{tpu_custom_call.1} parent=11 // pred_fallthru
          _
        // Predicated region
        $region29: #{tpu_custom_call.1} parent=11 // pred_check
          %p235 = pneg %p159
        $region30: #{tpu_custom_call.1} parent=11 // pred_check_branch
          %237 = sbr.rel (%p235) target = $region32
        $region31: #{tpu_custom_call.1} parent=11 // pred_region
          _
        $region32: #{tpu_custom_call.1} parent=11 // pred_fallthru
          _
        // Predicated region
        $region33: #{tpu_custom_call.1} parent=11 // pred_check
          %p238 = pneg %p180
        $region34: #{tpu_custom_call.1} parent=11 // pred_check_branch
          %240 = sbr.rel (%p238) target = $region36
        $region35: #{tpu_custom_call.1} parent=11 // pred_region
          _
        $region36: #{tpu_custom_call.1} parent=11 // pred_fallthru
          _
      $region12: #{tpu_custom_call.1} parent=5 // pred_fallthru
        _
      %p241 = scmp.lt.s32.totalorder %s16, 2
      // Predicated region
      $region37: #{tpu_custom_call.1} parent=5 // pred_check
        %p242 = pneg %p241
      $region38: #{tpu_custom_call.1} parent=5 // pred_check_branch
        %244 = sbr.rel (%p242) target = $region40
      $region39: #{tpu_custom_call.1} parent=5 // pred_region
        // Predicated region
        $region41: #{tpu_custom_call.1} parent=39 // pred_check
          %p245 = pneg %p48
        $region42: #{tpu_custom_call.1} parent=39 // pred_check_branch
          %247 = sbr.rel (%p245) target = $region44
        $region43: #{tpu_custom_call.1} parent=39 // pred_region
          %p248 = scmp.lt.s32.totalorder %s23, 1
          %s249 = scalar_select %p248, %s23, 1
          %s250 = smul.addr %s249, 2
          %s251 = smul.addr %s250, 8
          %s252 = scalar_lea.vmem %s0, %s251
        $region44: #{tpu_custom_call.1} parent=39 // pred_fallthru
          _
      $region40: #{tpu_custom_call.1} parent=5 // pred_fallthru
        _
      %p253 = scmp.le.s32.totalorder 1, %s16
      %p254 = scmp.lt.s32.totalorder %s16, 3
      %p255 = pnand %p253, %p254
      %p256 = pneg %p255
      // Predicated region
      $region45: #{tpu_custom_call.1} parent=5 // pred_check
        _
      $region46: #{tpu_custom_call.1} parent=5 // pred_check_branch
        %258 = sbr.rel (%p255) target = $region48
      $region47: #{tpu_custom_call.1} parent=5 // pred_region
        %s259 = ssub.s32 %s16, 1
        %p260 = scmp.lt.s32.totalorder %s25, 1
        %s261 = scalar_select %p260, %s25, 1
        %s262 = smul.addr %s261, 2
        %s263 = smul.addr %s262, 8
        %s264 = scalar_lea.vmem %s0, %s263
        %p265 = pneg %p54
        %p266 = pneg %p51
        %p267 = pneg %p75
        %p268 = pneg %p72
        %p269 = pneg %p96
        %p270 = pneg %p93
        %p271 = pneg %p117
        %p272 = pneg %p114
        %p273 = pneg %p138
        %p274 = pneg %p135
        %p275 = pneg %p159
        %p276 = pneg %p156
        %p277 = pneg %p180
        %p278 = pneg %p177
        %p279 = pneg %p208
        %p280 = pneg %p205
        %s281 = sand.u32 %s195, 1
        %s282 = scalar_lea.sflag [#allocation3], %s281
        %s283 = sand.u32 %s195, 1
        %s284 = smul.addr %s283, 8
        %s285 = scalar_lea.vmem [#allocation2], %s284
        %p286 = scmp.lt.s32.totalorder %s25, 1
        %s287 = scalar_select %p286, %s25, 1
        %s288 = smul.addr %s287, 2
        %s289 = smul.addr %s288, 8
        %s290 = scalar_lea.vmem %s0, %s289
        %s291 = smul.u32 %s26, 8
        %v292 = vld [vmem:[%s1] sm:$0x7]
        %s293 = scalar_lea.vmem %s290, %s291
        %v294 = vld [vmem:[%s293] sm:$0xff]
        %v295 = vlaneseq
        %v296 = vshrl.u32 %v295, 7
        %v297 = vsub.s32 0, %v296
        %v298 = vrot.slane %v292, %v297
        %v299 = vmul.f32 %v294, %v298
        %v300 = vld [vmem:[%s2] sm:$0x1]
        %v302 = vlaneseq
        %v303 = vshrl.u32 %v302, 7
        %v304 = vsub.s32 0, %v303
        %v305 = vrot.slane %v300, %v304
        %v307 = vadd.f32 %v299, %v305
        %v308 = vlaneseq
        %v309 = vshrl.u32 %v308, 7
        %v310 = vsub.s32 1, %v309
        %v311 = vrot.slane %v292, %v310
        %313 = vrot.lane.b32.xlu0 %v311, 4
        %v314 = vpop.permute.xlu0 %313
        %v316 = vmul.f32 %v294, %v314
        %318 = vrot.lane.b32.xlu0 %v316, 124
        %v319 = vpop.permute.xlu0 %318
        %v321 = vadd.f32 %v307, %v319
        %s322 = sadd.s32 %s291, 1
        %s323 = scalar_lea.vmem %s290, %s322
        %v324 = vld [vmem:[%s323] sm:$0xff]
        %v325 = vlaneseq
        %v326 = vshrl.u32 %v325, 7
        %v327 = vsub.s32 2, %v326
        %v328 = vrot.slane %v292, %v327
        %v329 = vmul.f32 %v324, %v328
        %v330 = vadd.f32 %v321, %v329
        %v331 = vmax.f32 %v330, 0.0
        %v332 = vld [vmem:[%s3] sm:$0xff]
        %v333 = vld [vmem:[%s4] sm:$0xff]
        %335 = vset.pattern.permute.xlu0 0
        %336 = vperm.xlu0 %335, %v333
        %v337 = vpop.permute.xlu0 %336
        %vm339 = vcmask 31744
        %v341 = vsel %vm339, %v332, 0
        %v344 = vsel %vm339, %v331, 0
        %346 = vmatprep.subr.mxu0 0.0
        %347 = vmatpush1.xpose.msra.mxu0 %v344
        %348 = vmatprep.subr.mxu0 0.0
        %349 = vmatpush1.xpose.msra.mxu0 0.0
        %350 = vmatprep.subr.mxu0 0.0
        %351 = vmatpush1.xpose.msra.mxu0 0.0
        %352 = vmatprep.subr.mxu0 0.0
        %353 = vmatpush1.xpose.msra.mxu0 0.0
        %354 = vmatprep.subr.mxu0 0.0
        %355 = vmatpush1.xpose.msra.mxu0 0.0
        %356 = vmatprep.subr.mxu0 0.0
        %357 = vmatpush1.xpose.msra.mxu0 0.0
        %358 = vmatprep.subr.mxu0 0.0
        %359 = vmatpush1.xpose.msra.mxu0 0.0
        %360 = vmatprep.subr.mxu0 0.0
        %361 = vmatpush1.xpose.msra.mxu0 0.0
        %362 = vmatprep.subr.mxu0 0.0
        %363 = vmatpush1.xpose.msra.mxu0 0.0
        %364 = vmatprep.subr.mxu0 0.0
        %365 = vmatpush1.xpose.msra.mxu0 0.0
        %366 = vmatprep.subr.mxu0 0.0
        %367 = vmatpush1.xpose.msra.mxu0 0.0
        %368 = vmatprep.subr.mxu0 0.0
        %369 = vmatpush1.xpose.msra.mxu0 0.0
        %370 = vmatprep.subr.mxu0 0.0
        %371 = vmatpush1.xpose.msra.mxu0 0.0
        %372 = vmatprep.subr.mxu0 0.0
        %373 = vmatpush1.xpose.msra.mxu0 0.0
        %374 = vmatprep.subr.mxu0 0.0
        %375 = vmatpush1.xpose.msra.mxu0 0.0
        %376 = vmatprep.subr.mxu0 0.0
        %377 = vmatpush1.xpose.msra.mxu0 0.0
        %378 = vmatprep.subr.mxu0 0.0
        %379 = vmatpush1.xpose.msra.mxu0 0.0
        %380 = vmatprep.subr.mxu0 0.0
        %381 = vmatpush1.xpose.msra.mxu0 0.0
        %382 = vmatprep.subr.mxu0 0.0
        %383 = vmatpush1.xpose.msra.mxu0 0.0
        %384 = vmatprep.subr.mxu0 0.0
        %385 = vmatpush1.xpose.msra.mxu0 0.0
        %386 = vmatprep.subr.mxu0 0.0
        %387 = vmatpush1.xpose.msra.mxu0 0.0
        %388 = vmatprep.subr.mxu0 0.0
        %389 = vmatpush1.xpose.msra.mxu0 0.0
        %390 = vmatprep.subr.mxu0 0.0
        %391 = vmatpush1.xpose.msra.mxu0 0.0
        %392 = vmatprep.subr.mxu0 0.0
        %393 = vmatpush1.xpose.msra.mxu0 0.0
        %394 = vmatprep.subr.mxu0 0.0
        %395 = vmatpush1.xpose.msra.mxu0 0.0
        %396 = vmatprep.subr.mxu0 0.0
        %397 = vmatpush1.xpose.msra.mxu0 0.0
        %398 = vmatprep.subr.mxu0 0.0
        %399 = vmatpush1.xpose.msra.mxu0 0.0
        %400 = vmatprep.subr.mxu0 0.0
        %401 = vmatpush1.xpose.msra.mxu0 0.0
        %402 = vmatprep.subr.mxu0 0.0
        %403 = vmatpush1.xpose.msra.mxu0 0.0
        %404 = vmatprep.subr.mxu0 0.0
        %405 = vmatpush1.xpose.msra.mxu0 0.0
        %406 = vmatprep.subr.mxu0 0.0
        %407 = vmatpush1.xpose.msra.mxu0 0.0
        %408 = vmatprep.subr.mxu0 0.0
        %409 = vmatpush1.xpose.msra.mxu0 0.0
        %410 = vmatprep.mubr.f32.mxu0 0.0
        %411 = vmatmul.mubr.f32.gmra.mrb[0].mxu0 %v341
        %v412 = vpop.f32.mrb[0].mxu0
        %v413 = vadd.f32 %v337, %v412
        %v414 = vpop.f32.mrb[0].mxu0
        %415 = vdwg.mxu0
        %vm416 = vcmask 64512
        %v417 = vsel %vm416, %v413, 0.0
        %v418 = vrot.slane %v417, 4
        %v419 = vadd.f32 %v417, %v418
        %v420 = vrot.slane %v419, 2
        %v421 = vadd.f32 %v419, %v420
        %v422 = vrot.slane %v421, 1
        %v423 = vadd.f32 %v421, %v422
        %v424 = vrcp.pop 8.0
        %v425 = vmul.f32 %v423, %v424
        %v426 = vsub.f32 %v413, %v425
        %v427 = vmul.f32 %v426, %v426
        %v428 = vsel %vm416, %v427, 0.0
        %v429 = vrot.slane %v428, 4
        %v430 = vadd.f32 %v428, %v429
        %v431 = vrot.slane %v430, 2
        %v432 = vadd.f32 %v430, %v431
        %v433 = vrot.slane %v432, 1
        %v434 = vadd.f32 %v432, %v433
        %v435 = vmul.f32 %v434, %v424
        %v436 = vadd.f32 %v435, 1e-05
        %v437 = vrsqrt.pop %v436
        %v438 = vmul.f32 %v426, %v437
        %v439 = vld [vmem:[%s5] sm:$0xff]
        %441 = vset.pattern.permute.xlu0 0
        %442 = vperm.xlu0 %441, %v439
        %v443 = vpop.permute.xlu0 %442
        %v445 = vmul.f32 %v438, %v443
        %v446 = vld [vmem:[%s6] sm:$0xff]
        %448 = vset.pattern.permute.xlu0 0
        %449 = vperm.xlu0 %448, %v446
        %v450 = vpop.permute.xlu0 %449
        %v452 = vadd.f32 %v445, %v450
        %453 = vst.msk [vmem:[%s285] sm:$0xff] %vm416, %v452
        %s454 = sand.u32 %s195, 1
        %s455 = scalar_lea.sflag [#allocation3], %s454
        %s456 = sand.u32 %s195, 1
        %s457 = smul.addr %s456, 8
        %s458 = scalar_lea.vmem [#allocation2], %s457
        // Predicated region
        $region49: #{tpu_custom_call.1} parent=47 // pred_check
          %p459 = pneg %p205
        $region50: #{tpu_custom_call.1} parent=47 // pred_check_branch
          %461 = sbr.rel (%p459) target = $region52
        $region51: #{tpu_custom_call.1} parent=47 // pred_region
          %s463 = ssub.s32 128, 128
          %464 = vsyncadd %s455, %s463
          %s465 = sadd.s32 %s26, %s25
          %s466 = smul.addr %s465, 128
          %s467 = scalar_lea.hbm %s7, %s466
          %s469 = sshll.u32 %s458, 4
          %s470 = int_to_ptr.vmem [resolvable:$true] %s469
          %472 = dma.vmem_to_hbm [thread:$0]  %s470, 128, %s467, %s455
        $region52: #{tpu_custom_call.1} parent=47 // pred_fallthru
          _
      $region48: #{tpu_custom_call.1} parent=5 // pred_fallthru
        _
      %p473 = scmp.le.s32.totalorder 2, %s16
      // Predicated region
      $region53: #{tpu_custom_call.1} parent=5 // pred_check
        %p474 = pneg %p473
      $region54: #{tpu_custom_call.1} parent=5 // pred_check_branch
        %476 = sbr.rel (%p474) target = $region56
      $region55: #{tpu_custom_call.1} parent=5 // pred_region
        %s477 = ssub.s32 %s16, 2
        // Predicated region
        $region57: #{tpu_custom_call.1} parent=55 // pred_check
          %p478 = pneg %p211
        $region58: #{tpu_custom_call.1} parent=55 // pred_check_branch
          %480 = sbr.rel (%p478) target = $region60
        $region59: #{tpu_custom_call.1} parent=55 // pred_region
          %s481 = sand.u32 %s196, 1
          %s482 = scalar_lea.sflag [#allocation3], %s481
          %s483 = sand.u32 %s196, 1
          %s484 = smul.addr %s483, 8
          %s485 = scalar_lea.vmem [#allocation2], %s484
          %486 = dma.done %s482, 128
        $region60: #{tpu_custom_call.1} parent=55 // pred_fallthru
          _
      $region56: #{tpu_custom_call.1} parent=5 // pred_fallthru
        _
    $region6: #{tpu_custom_call.1} parent=1 // loop_footer
      %s20 = sadd.s32 1, %s16
    $region7: #{tpu_custom_call.1} parent=1 // loop_footer_branch
      %15 = sbr.rel target = $region3
    $region8: #{tpu_custom_call.1} parent=1 // loop_exit
      _
    %487 = vsyncpa [#allocation3], 1
    %s488 = scalar_lea.sflag [#allocation3], 1
    %489 = vsyncpa %s488, 1

</llo_original>
